<compile_context>
chip_gen: v5e
topology: v5e:2x2
jax: 0.10.0
libtpu: 0.0.40
codegen_flags: <defaults>
</compile_context>

<pallas_src>
import jax
import jax.numpy as jnp
from jax import lax
from jax.experimental import pallas as pl
from jax.experimental.pallas import tpu as pltpu


def _round_up(x, m):
    return ((x + m - 1) // m) * m


def _make_kernel(n, c, t, tile_n, chunk, x_dtype):
    ct = c * t
    num_chunks = tile_n // chunk

    def kernel(x_ref, tgt_ref, out_ref):
        # x_ref:   (tile_n, C*T) native dtype in VMEM
        # tgt_ref: (tile_n, 1)   int32 in VMEM
        # out_ref: (1, 8, 128)   f32 lane-dense per-tile partial NLL sum

        # Block-diagonal ones matrix E[ci*T + ti, cj] = (ci == cj), built on the VPU
        # (no integer div) so there is no extra HBM input.  Built once per grid step,
        # hoisted out of the chunk loop; fully hidden under the block DMA.
        rows = lax.broadcasted_iota(jnp.int32, (ct, c), 0)
        cols = lax.broadcasted_iota(jnp.int32, (ct, c), 1)
        e = ((rows >= cols * t) & (rows < (cols + 1) * t)).astype(x_dtype)

        base = pl.program_id(0) * tile_n

        def one_chunk(r0):
            # Native-dtype slice of the resident block; no f32 upcast of the spikes.
            xs = x_ref[pl.ds(r0, chunk), :]                       # (chunk, C*T)
            tg = tgt_ref[pl.ds(r0, chunk), :]                     # (chunk, 1) int32
            # Time-sum as an MXU matmul, f32 accumulation.
            s = jnp.dot(xs, e, preferred_element_type=jnp.float32)  # (chunk, C) f32
            m = jnp.max(s, axis=1, keepdims=True)
            lse = m + jnp.log(jnp.sum(jnp.exp(s - m), axis=1, keepdims=True))
            # Correct-class logit via one-hot select (no gathers).
            cls = lax.broadcasted_iota(jnp.int32, (chunk, c), 1)
            s_tgt = jnp.sum(jnp.where(cls == tg, s, 0.0), axis=1, keepdims=True)
            nll = lse - s_tgt                                     # (chunk, 1)
            # Mask rows past the true batch size: the ragged last block reads
            # undefined data (possibly NaN/Inf), so select (not multiply) them away.
            rid = base + r0 + lax.broadcasted_iota(jnp.int32, (chunk, 1), 0)
            nll = jnp.where(rid < n, nll, 0.0)
            return jnp.sum(nll, keepdims=True)                    # (1, 1)

        if num_chunks == 1:
            total = one_chunk(0)
        else:
            total = lax.fori_loop(
                0, num_chunks,
                lambda j, acc: acc + one_chunk(pl.multiple_of(j * chunk, chunk)),
                jnp.zeros((1, 1), jnp.float32))

        # Lane-dense, unmasked full-block store of the per-tile partial sum.
        out_ref[...] = jnp.full(out_ref.shape, total[0, 0], dtype=jnp.float32)

    return kernel


def spike_softmax_loss(outputs, target):
    """outputs: (N, C, 1, 1, T) spikes, target: (N,) int class ids -> scalar f32 loss."""
    n, c, h, w, t = outputs.shape
    assert h == 1 and w == 1, "squeeze(-1).squeeze(-1) assumes H = W = 1"
    ct = c * t

    # Native dtype straight through; plain reshapes only (no padding copy, no cast).
    x = outputs.reshape(n, ct)
    tgt = target.reshape(n, 1).astype(jnp.int32)
    itemsize = jnp.dtype(x.dtype).itemsize

    # ---- VMEM budget: trace-time query, fall back to v7x's 64 MiB per TensorCore ----
    try:
        vmem_cap = int(pltpu.get_tpu_info().vmem_capacity_bytes)
    except Exception:
        vmem_cap = 64 * 1024 * 1024
    if vmem_cap <= 0:
        vmem_cap = 64 * 1024 * 1024
    vmem_limit = min(int(vmem_cap * 0.8), vmem_cap - 8 * 1024 * 1024)
    vmem_limit = max(32 * 1024 * 1024, min(vmem_limit, 128 * 1024 * 1024))

    # Lane-padded VMEM footprint per batch row of the double-buffered input blocks.
    lanes_x = _round_up(ct, 128)
    lanes_c = _round_up(c, 128)
    row_vmem = 2 * lanes_x * itemsize + 2 * 128 * 4        # x block + target block
    # Headroom: in-kernel E + chunk-sized f32 intermediates + output blocks / misc.
    headroom = ct * lanes_c * itemsize + 8 * 512 * lanes_c * 4 + 4 * 1024 * 1024
    block_budget = max(vmem_limit - headroom, 8 * 1024 * 1024)

    # ---- tile sizing: biggest batch tile whose padded footprint fits the budget,
    #      processed in fixed row-chunks inside the kernel. ----
    chunk = min(512, max(8, (block_budget // row_vmem) // 8 * 8))
    if n <= chunk:
        chunk = max(n, 1)          # exact block == full array dims; no ragged edge
        tile_n = chunk
    else:
        tile_n = max(chunk, (block_budget // row_vmem) // chunk * chunk)
        tile_n = min(tile_n, _round_up(n, chunk))
        # v7x megacore: keep >= 2 grid steps so both TensorCores get work.
        if pl.cdiv(n, tile_n) < 2:
            tile_n = _round_up(pl.cdiv(n, 2), chunk)
    num_tiles = pl.cdiv(n, tile_n)

    kernel = _make_kernel(n, c, t, tile_n, chunk, x.dtype)

    cost = pl.CostEstimate(
        flops=2 * n * ct * c + 10 * n * c,
        transcendentals=n * (c + 1),
        bytes_accessed=n * ct * itemsize + n * 4 + num_tiles * 8 * 128 * 4,
    )

    out = pl.pallas_call(
        kernel,
        out_shape=jax.ShapeDtypeStruct((num_tiles, 8, 128), jnp.float32),
        grid=(num_tiles,),
        in_specs=[
            pl.BlockSpec((tile_n, ct), lambda i: (i, 0)),   # spikes, batch-tiled
            pl.BlockSpec((tile_n, 1), lambda i: (i, 0)),    # targets, batch-tiled
        ],
        out_specs=pl.BlockSpec((1, 8, 128), lambda i: (i, 0, 0)),
        compiler_params=pltpu.CompilerParams(
            dimension_semantics=("parallel",),              # megacore-shardable (v7x)
            vmem_limit_bytes=vmem_limit,
        ),
        cost_estimate=cost,
    )(x, tgt)

    # Final reduction of per-tile partial sums + mean over the true batch size.
    return jnp.sum(out[:, 0, 0]) / jnp.float32(n)


if __name__ == "__main__":
    key = jax.random.PRNGKey(0)
    k1, k2, k3, k4 = jax.random.split(key, 4)

    def ref_loss(outputs, target):
        # pure-JAX reference matching the PyTorch module (CE re-applies log_softmax)
        n_, c_ = outputs.shape[0], outputs.shape[1]
        s = outputs.sum(axis=4).reshape(n_, c_)
        delta = jax.nn.log_softmax(s, axis=1)
        logp = jax.nn.log_softmax(delta, axis=1)
        return -jnp.mean(logp[jnp.arange(n_), target])

    # Case 1: the module's nominal small shape.
    N, C, T = 2, 4, 8
    outputs = jax.random.normal(k1, (N, C, 1, 1, T), dtype=jnp.float32)
    target = jax.random.randint(k2, (N,), 0, C, dtype=jnp.int32)
    loss = spike_softmax_loss(outputs, target)
    jax.block_until_ready(loss)
    assert jnp.allclose(loss, ref_loss(outputs, target), atol=1e-5, rtol=1e-5), (
        loss, ref_loss(outputs, target))

    # Case 2: batch not a multiple of 8 (exact, non-padded single block).
    N2 = 5
    o2 = jax.random.normal(k1, (N2, C, 1, 1, T), dtype=jnp.float32)
    t2 = jax.random.randint(k2, (N2,), 0, C, dtype=jnp.int32)
    l2 = spike_softmax_loss(o2, t2)
    jax.block_until_ready(l2)
    assert jnp.allclose(l2, ref_loss(o2, t2), atol=1e-5, rtol=1e-5), (l2, ref_loss(o2, t2))

    # Case 3: multi-tile grid, in-kernel chunk loop, ragged masked last block.
    N3, C3, T3 = 1200, 10, 4
    o3 = jax.random.normal(k3, (N3, C3, 1, 1, T3), dtype=jnp.float32)
    t3 = jax.random.randint(k4, (N3,), 0, C3, dtype=jnp.int32)
    l3 = spike_softmax_loss(o3, t3)
    jax.block_until_ready(l3)
    assert jnp.allclose(l3, ref_loss(o3, t3), atol=1e-5, rtol=1e-5), (l3, ref_loss(o3, t3))

    print("KERNEL_OK")
</pallas_src>

<mosaic_0001>
module attributes {stable_mosaic.version = 11 : i64} {
  func.func @kernel(%arg0: i32, %arg1: memref<2x32xf32, #tpu.memory_space<vmem>>, %arg2: memref<2x1xi32, #tpu.memory_space<vmem>>, %arg3: memref<1x8x128xf32, #tpu.memory_space<vmem>>) attributes {dimension_semantics = [#tpu.dimension_semantics<parallel>], iteration_bounds = array<i64: 1>, scalar_prefetch = 0 : i64, scratch_operands = 0 : i64, tpu.core_type = #tpu.core_type<tc>, window_params = [{transform_indices = @transform_0, window_bounds = array<i64: 2, 32>}, {transform_indices = @transform_1, window_bounds = array<i64: 2, 1>}, {transform_indices = @transform_2, window_bounds = array<i64: 1, 8, 128>}]} {
    %0 = tpu.iota {dimensions = array<i32: 0>} : vector<32x4xi32>
    %1 = tpu.iota {dimensions = array<i32: 1>} : vector<32x4xi32>
    %c8_i32 = arith.constant 8 : i32
    %2 = vector.broadcast %c8_i32 : i32 to vector<32x4xi32>
    %3 = arith.muli %1, %2 : vector<32x4xi32>
    %4 = arith.cmpi sge, %0, %3 : vector<32x4xi32>
    %c1_i32 = arith.constant 1 : i32
    %5 = vector.broadcast %c1_i32 : i32 to vector<32x4xi32>
    %6 = arith.addi %1, %5 : vector<32x4xi32>
    %c8_i32_0 = arith.constant 8 : i32
    %7 = vector.broadcast %c8_i32_0 : i32 to vector<32x4xi32>
    %8 = arith.muli %6, %7 : vector<32x4xi32>
    %9 = arith.cmpi slt, %0, %8 : vector<32x4xi32>
    %10 = arith.andi %4, %9 : vector<32x4xi1>
    %11 = arith.extui %10 : vector<32x4xi1> to vector<32x4xi32>
    %12 = arith.sitofp %11 : vector<32x4xi32> to vector<32x4xf32>
    %c2_i32 = arith.constant 2 : i32
    %13 = arith.muli %arg0, %c2_i32 : i32
    %c0 = arith.constant 0 : index
    %c0_1 = arith.constant 0 : index
    %14 = vector.load %arg1[%c0, %c0_1] : memref<2x32xf32, #tpu.memory_space<vmem>>, vector<2x32xf32>
    %c0_2 = arith.constant 0 : index
    %c0_3 = arith.constant 0 : index
    %15 = vector.load %arg2[%c0_2, %c0_3] : memref<2x1xi32, #tpu.memory_space<vmem>>, vector<2x1xi32>
    %cst = arith.constant dense<0.000000e+00> : vector<2x4xf32>
    %16 = tpu.matmul %14, %12, %cst {dimension_numbers = #tpu.dot_dimension_numbers<[1], [0], [0], [1], [0, 0, 1, 1], [], []>} : vector<2x32xf32>, vector<32x4xf32>, vector<2x4xf32> -> vector<2x4xf32>
    %cst_4 = arith.constant dense<0xFF800000> : vector<2xf32>
    %17 = vector.multi_reduction <maximumf>, %16, %cst_4 [1] : vector<2x4xf32> to vector<2xf32>
    %18 = vector.shape_cast %17 : vector<2xf32> to vector<2x1xf32>
    %19 = vector.broadcast %18 : vector<2x1xf32> to vector<2x4xf32>
    %20 = arith.subf %16, %19 : vector<2x4xf32>
    %21 = math.exp %20 : vector<2x4xf32>
    %cst_5 = arith.constant dense<0.000000e+00> : vector<2xf32>
    %22 = vector.multi_reduction <add>, %21, %cst_5 [1] : vector<2x4xf32> to vector<2xf32>
    %23 = vector.shape_cast %22 : vector<2xf32> to vector<2x1xf32>
    %24 = math.log %23 : vector<2x1xf32>
    %25 = arith.addf %18, %24 : vector<2x1xf32>
    %26 = tpu.iota {dimensions = array<i32: 1>} : vector<2x4xi32>
    %27 = vector.broadcast %15 : vector<2x1xi32> to vector<2x4xi32>
    %28 = arith.cmpi eq, %26, %27 : vector<2x4xi32>
    %cst_6 = arith.constant 0.000000e+00 : f32
    %29 = vector.broadcast %cst_6 : f32 to vector<2x4xf32>
    %30 = arith.select %28, %16, %29 : vector<2x4xi1>, vector<2x4xf32>
    %cst_7 = arith.constant dense<0.000000e+00> : vector<2xf32>
    %31 = vector.multi_reduction <add>, %30, %cst_7 [1] : vector<2x4xf32> to vector<2xf32>
    %32 = vector.shape_cast %31 : vector<2xf32> to vector<2x1xf32>
    %33 = arith.subf %25, %32 : vector<2x1xf32>
    %c0_i32 = arith.constant 0 : i32
    %34 = arith.addi %13, %c0_i32 : i32
    %35 = tpu.iota {dimensions = array<i32: 0>} : vector<2x1xi32>
    %36 = vector.broadcast %34 : i32 to vector<2x1xi32>
    %37 = arith.addi %36, %35 : vector<2x1xi32>
    %c2_i32_8 = arith.constant 2 : i32
    %38 = vector.broadcast %c2_i32_8 : i32 to vector<2x1xi32>
    %39 = arith.cmpi slt, %37, %38 : vector<2x1xi32>
    %cst_9 = arith.constant 0.000000e+00 : f32
    %40 = vector.broadcast %cst_9 : f32 to vector<2x1xf32>
    %41 = arith.select %39, %33, %40 : vector<2x1xi1>, vector<2x1xf32>
    %42 = vector.shape_cast %41 : vector<2x1xf32> to vector<1x2x1xf32>
    %cst_10 = arith.constant dense<0.000000e+00> : vector<1xf32>
    %43 = vector.multi_reduction <add>, %42, %cst_10 [1, 2] : vector<1x2x1xf32> to vector<1xf32>
    %44 = vector.shape_cast %43 : vector<1xf32> to vector<1x1x1xf32>
    %45 = vector.extract %44[0, 0, 0] : f32 from vector<1x1x1xf32>
    %46 = vector.broadcast %45 : f32 to vector<1x1xf32>
    %47 = vector.extract %46[0, 0] : f32 from vector<1x1xf32>
    %48 = vector.broadcast %47 : f32 to vector<1x8x128xf32>
    %c0_11 = arith.constant 0 : index
    %c0_12 = arith.constant 0 : index
    %c0_13 = arith.constant 0 : index
    %49 = vector.load %arg3[%c0_11, %c0_12, %c0_13] : memref<1x8x128xf32, #tpu.memory_space<vmem>>, vector<1x8x128xf32>
    tpu.vector_store %arg3[%c0_11, %c0_12, %c0_13], %48 {strides = array<i32>} : memref<1x8x128xf32, #tpu.memory_space<vmem>>, vector<1x8x128xf32>,
    return
  }
  func.func @transform_0(%arg0: i32) -> (i32, i32) {
    %c0_i32 = arith.constant 0 : i32
    %c0_i32_0 = arith.constant 0 : i32
    return %arg0, %c0_i32 : i32, i32
  }
  func.func @transform_1(%arg0: i32) -> (i32, i32) {
    %c0_i32 = arith.constant 0 : i32
    %c0_i32_0 = arith.constant 0 : i32
    return %arg0, %c0_i32 : i32, i32
  }
  func.func @transform_2(%arg0: i32) -> (i32, i32, i32) {
    %c0_i32 = arith.constant 0 : i32
    %c0_i32_0 = arith.constant 0 : i32
    %c0_i32_1 = arith.constant 0 : i32
    return %arg0, %c0_i32, %c0_i32_0 : i32, i32, i32
  }
}

</mosaic_0001>

<llo_original>
// kernel: tpu_custom_call.1
$region0: #{tpu_custom_call.1}
  #allocation0 [shape = 'u32[]', space=smem, size = 0x4, offset = 0x4, fixed_abs, tag = 'smem constant byte address 0x4 - core index']
  #allocation1 [shape = 'u32[72,128]{1,0:T(1,128)}', space=vmem, size = 0x9000, scoped, tag = 'internal scratch']
  %s0 = inlined_call_operand.vmem [shape: f32[2,32], index: 0, kind: input, shape index: {}]
  %s1 = inlined_call_operand.vmem [shape: s32[2,1], index: 1, kind: input, shape index: {}]
  %s2 = inlined_call_operand.hbm [shape: f32[1,8,128], index: 2, kind: output, shape index: {}]
  %s3 = sld [smem:[#allocation0]]
  $region18: #{tpu_custom_call.1} parent=0
    _
  %s5 = ssub.s32 1, %s3
  %s6 = scalar_select 0, %s5, %s3
  $region1: #{tpu_custom_call.1} parent=0
    #allocation2 [shape = 'u8[4096]{0}', space=vmem, size = 0x1000, scoped, tag = 'output window, operand 0, single buffered']
    #allocation3 [shape = 's32[1]{0}', space=sflag, size = 0x4, scoped, tag = 'scoped memory for tpu_custom_call.1']
    %7 = vsyncpa [#allocation3], 0
    // Predicated region
    $region2: #{tpu_custom_call.1} parent=1 // pred_check
      _
    $region3: #{tpu_custom_call.1} parent=1 // pred_check_branch
      %9 = sbr.rel (0) target = $region5
    $region4: #{tpu_custom_call.1} parent=1 // pred_region
      _
    $region5: #{tpu_custom_call.1} parent=1 // pred_fallthru
      _
    // Predicated region
    $region6: #{tpu_custom_call.1} parent=1 // pred_check
      _
    $region7: #{tpu_custom_call.1} parent=1 // pred_check_branch
      %11 = sbr.rel (0) target = $region9
    $region8: #{tpu_custom_call.1} parent=1 // pred_region
      _
    $region9: #{tpu_custom_call.1} parent=1 // pred_fallthru
      _
    %v12 = vlaneseq
    %v13 = vshrl.u32 %v12, 7
    %v14 = vadd.s32 %v13, 8
    %v15 = vadd.s32 %v13, 16
    %v16 = vadd.s32 %v13, 24
    %v17 = vlaneseq
    %v18 = vand.u32 %v17, 127
    %v19 = vmul.u32 %v18, 8
    %vm20 = vcmp.ge.s32.totalorder %v13, %v19
    %vm21 = vcmp.ge.s32.totalorder %v14, %v19
    %vm22 = vcmp.ge.s32.totalorder %v15, %v19
    %vm23 = vcmp.ge.s32.totalorder %v16, %v19
    %v24 = vadd.s32 %v18, 1
    %v25 = vmul.u32 %v24, 8
    %vm26 = vcmp.lt.s32.totalorder %v13, %v25
    %vm27 = vcmp.lt.s32.totalorder %v14, %v25
    %vm28 = vcmp.lt.s32.totalorder %v15, %v25
    %vm29 = vcmp.lt.s32.totalorder %v16, %v25
    %vm30 = vmand %vm20, %vm26
    %vm31 = vmand %vm21, %vm27
    %vm32 = vmand %vm22, %vm28
    %vm33 = vmand %vm23, %vm29
    %v34 = vsel %vm30, 1, 0
    %v35 = vsel %vm31, 1, 0
    %v36 = vsel %vm32, 1, 0
    %v37 = vsel %vm33, 1, 0
    %v38 = vcvt.s32.f32 %v34
    %v39 = vcvt.s32.f32 %v35
    %v40 = vcvt.s32.f32 %v36
    %v41 = vcvt.s32.f32 %v37
    %s42 = smul.u32 0, 2
    %v43 = vld [vmem:[%s0] sm:$0x3]
    %v44 = vld [vmem:[%s1] sm:$0x3]
    %vm45 = vcmask 261120
    %v47 = vsel %vm45, %v43, 0
    %49 = vmatpush.msra.mxu0 0.0
    %50 = vmatpush.msra.mxu0 0.0
    %51 = vmatpush.msra.mxu0 0.0
    %52 = vmatpush.msra.mxu0 0.0
    %53 = vmatpush.msra.mxu0 0.0
    %54 = vmatpush.msra.mxu0 0.0
    %55 = vmatpush.msra.mxu0 0.0
    %56 = vmatpush.msra.mxu0 0.0
    %57 = vmatpush.msra.mxu0 0.0
    %58 = vmatpush.msra.mxu0 0.0
    %59 = vmatpush.msra.mxu0 0.0
    %60 = vmatpush.msra.mxu0 0.0
    %61 = vmatpush.msra.mxu0 %v41
    %62 = vmatpush.msra.mxu0 %v40
    %63 = vmatpush.msra.mxu0 %v39
    %64 = vmatpush.msra.mxu0 %v38
    %65 = vmatmul.f32.gmra.mxu0 %v47
    %v66 = vpop.f32.mrf.mxu0
    %v67 = vadd.f32 0.0, %v66
    %68 = vdwg.mxu0
    %vm69 = vcmask 25600
    %v70 = vsel %vm69, %v67, -inf
    %71 = vmax.xlane.f32.xlu0 %v70
    %v72 = vpop.xlane.xlu0 %71
    %v73 = vsub.f32 %v67, %v72
    %v74 = vmul.f32 %v73, 1.442695
    %v75 = vpow.pop %v74
    %v76 = vsel %vm69, %v75, 0.0
    %77 = vadd.xlane.f32.xlu0 %v76
    %v78 = vpop.xlane.xlu0 %77
    %v79 = vlog2.pop %v78
    %v80 = vmul.f32 %v79, 0.6931472
    %v81 = vadd.f32 %v72, %v80
    %82 = vset.pattern.permute.xlu0 0
    %83 = vperm.xlu0 %82, %v44
    %v84 = vpop.permute.xlu0 %83
    %vm85 = vcmp.eq.s32.totalorder %v18, %v84
    %v86 = vsel %vm85, %v67, 0.0
    %v87 = vsel %vm69, %v86, 0.0
    %88 = vadd.xlane.f32.xlu0 %v87
    %v89 = vpop.xlane.xlu0 %88
    %v90 = vsub.f32 %v81, %v89
    %v91 = vstv %s42
    %v92 = vadd.s32 %v91, %v13
    %vm93 = vcmp.lt.s32.totalorder %v92, 2
    %v94 = vsel %vm93, %v90, 0.0
    %vm95 = vcmask 1024
    %v96 = vsel %vm95, %v94, 0.0
    %97 = vadd.xlane.f32.xlu0 %v96
    %v98 = vpop.xlane.xlu0 %97
    %v99 = vrot.slane %v98, 4
    %v100 = vadd.f32 %v98, %v99
    %v101 = vrot.slane %v100, 2
    %v102 = vadd.f32 %v100, %v101
    %v103 = vrot.slane %v102, 1
    %v104 = vadd.f32 %v102, %v103
    %s105 = vtos %v104
    %v106 = vstv %s105
    %107 = vst [vmem:[#allocation2] sm:$0xff] %v106
    // Predicated region
    $region10: #{tpu_custom_call.1} parent=1 // pred_check
      _
    $region11: #{tpu_custom_call.1} parent=1 // pred_check_branch
      %109 = sbr.rel (0) target = $region13
    $region12: #{tpu_custom_call.1} parent=1 // pred_region
      %111 = vsyncadd [#allocation3], 0
      %s113 = sshll.u32 [#allocation2], 4
      %s114 = int_to_ptr.vmem [resolvable:$true] %s113
      %s115 = sshll.u32 %s2, 4
      %s116 = int_to_ptr.hbm [resolvable:$true] %s115
      %118 = dma.vmem_to_hbm [thread:$0]  %s114, 128, %s116, [#allocation3]
    $region13: #{tpu_custom_call.1} parent=1 // pred_fallthru
      _
    // Predicated region
    $region14: #{tpu_custom_call.1} parent=1 // pred_check
      _
    $region15: #{tpu_custom_call.1} parent=1 // pred_check_branch
      %120 = sbr.rel (0) target = $region17
    $region16: #{tpu_custom_call.1} parent=1 // pred_region
      %122 = dma.done [#allocation3], 128
    $region17: #{tpu_custom_call.1} parent=1 // pred_fallthru
      _
    %123 = vsyncpa [#allocation3], 1

</llo_original>
